<compile_context>
chip_gen: v7x
topology: tpu7x:2x2x1
jax: 0.10.0
libtpu: 0.0.40
codegen_flags: <defaults>
</compile_context>

<pallas_src>
import jax
import jax.numpy as jnp
import numpy as np
from jax import lax
from jax.experimental import pallas as pl
from jax.experimental.pallas import tpu as pltpu


def _round_up(x, m):
    return ((x + m - 1) // m) * m


def _classifier_kernel(tok_ref, start_ref, end_ref, inv_ref,
                       emb_ref, w_ref, b_ref, out_ref):
    """One batch tile: EmbeddingBag(mean) via counts-matmul, then Linear."""
    bag_tile = out_ref.shape[0]
    t_pad = tok_ref.shape[0]
    vocab_pad = emb_ref.shape[0]

    # Segment-membership matrix for this tile: seg[b, t] = 1 iff token t is in
    # bag b (t in [start_b, end_b)).  Padded token slots (t >= total) and
    # padded bag rows (start == end == 0) automatically get 0.
    t_iota = lax.broadcasted_iota(jnp.int32, (bag_tile, t_pad), 1)
    in_bag = (t_iota >= start_ref[...]) & (t_iota < end_ref[...])
    seg = in_bag.astype(jnp.float32)                           # (BT, T_pad)

    # Token one-hot: onehot[t, v] = 1 iff token t == vocab id v.  Padded /
    # out-of-range tokens (-1 or >= vocab) match no column -> contribute 0.
    v_iota = lax.broadcasted_iota(jnp.int32, (t_pad, vocab_pad), 1)
    onehot = (tok_ref[...] == v_iota).astype(jnp.float32)      # (T_pad, V_pad)

    # counts[b, v] = multiplicity of vocab id v in bag b (exact small ints).
    counts = jnp.dot(seg, onehot, preferred_element_type=jnp.float32)

    # EmbeddingBag(mean): sum of embedding rows, then exact 1/len scale
    # (1/max(len,1) so empty bags yield zeros, matching PyTorch).
    pooled = jnp.dot(counts, emb_ref[...],
                     preferred_element_type=jnp.float32) * inv_ref[...]

    # Linear: pooled @ W^T + b (W passed pre-transposed and zero-padded).
    out_ref[...] = (jnp.dot(pooled, w_ref[...],
                            preferred_element_type=jnp.float32)
                    + b_ref[...])


def simple_text_classifier(text, offsets, emb_weight, fc_weight, fc_bias,
                           *, bag_tile=8):
    """text: (T,) int tokens; offsets: (B,) int bag starts (offsets[0] == 0)."""
    total = int(text.shape[0])
    batch = int(offsets.shape[0])
    vocab, embed_dim = emb_weight.shape
    num_class = fc_weight.shape[0]

    # Lane/sublane-dense padded sizes.
    t_pad = _round_up(max(total, 1), 128)
    vocab_pad = _round_up(vocab, 128)
    d_pad = _round_up(embed_dim, 128)
    c_pad = _round_up(num_class, 128)
    batch_pad = _round_up(batch, bag_tile)

    # --- host-side padding / metadata (cheap, O(T + B + params)) ----------
    tokens = jnp.full((t_pad, 1), -1, jnp.int32)
    tokens = tokens.at[:total, 0].set(text.astype(jnp.int32))

    offsets32 = offsets.astype(jnp.int32)
    ends_real = jnp.concatenate(
        [offsets32[1:], jnp.array([total], dtype=jnp.int32)])
    starts = jnp.zeros((batch_pad, 1), jnp.int32).at[:batch, 0].set(offsets32)
    ends = jnp.zeros((batch_pad, 1), jnp.int32).at[:batch, 0].set(ends_real)
    lengths = (ends - starts).astype(jnp.float32)
    inv_len = 1.0 / jnp.maximum(lengths, 1.0)                   # (Bp, 1) f32

    emb_p = jnp.zeros((vocab_pad, d_pad), jnp.float32)
    emb_p = emb_p.at[:vocab, :embed_dim].set(emb_weight.astype(jnp.float32))
    w_p = jnp.zeros((d_pad, c_pad), jnp.float32)
    w_p = w_p.at[:embed_dim, :num_class].set(fc_weight.T.astype(jnp.float32))
    b_p = jnp.zeros((1, c_pad), jnp.float32)
    b_p = b_p.at[0, :num_class].set(fc_bias.astype(jnp.float32))

    grid = (batch_pad // bag_tile,)

    out_padded = pl.pallas_call(
        _classifier_kernel,
        out_shape=jax.ShapeDtypeStruct((batch_pad, c_pad), jnp.float32),
        grid=grid,
        in_specs=[
            pl.BlockSpec((t_pad, 1), lambda i: (0, 0)),          # tokens
            pl.BlockSpec((bag_tile, 1), lambda i: (i, 0)),       # starts
            pl.BlockSpec((bag_tile, 1), lambda i: (i, 0)),       # ends
            pl.BlockSpec((bag_tile, 1), lambda i: (i, 0)),       # 1/len
            pl.BlockSpec((vocab_pad, d_pad), lambda i: (0, 0)),  # embedding
            pl.BlockSpec((d_pad, c_pad), lambda i: (0, 0)),      # W^T (padded)
            pl.BlockSpec((1, c_pad), lambda i: (0, 0)),          # bias
        ],
        out_specs=pl.BlockSpec((bag_tile, c_pad), lambda i: (i, 0)),
        compiler_params=pltpu.CompilerParams(
            dimension_semantics=("parallel",),       # batch tiles across TCs
            vmem_limit_bytes=32 * 1024 * 1024,       # raise v5e's 16 MiB cap
        ),
    )(tokens, starts, ends, inv_len, emb_p, w_p, b_p)

    return out_padded[:batch, :num_class]


def _reference_forward(text, offsets, emb_weight, fc_weight, fc_bias):
    """CPU/numpy reference mirroring nn.EmbeddingBag(mean) + nn.Linear."""
    text = np.asarray(text)
    offsets = np.asarray(offsets)
    emb = np.asarray(emb_weight, dtype=np.float32)
    w = np.asarray(fc_weight, dtype=np.float32)
    b = np.asarray(fc_bias, dtype=np.float32)
    batch = offsets.shape[0]
    total = text.shape[0]
    ends = np.concatenate([offsets[1:], np.array([total])])
    pooled = np.zeros((batch, emb.shape[1]), np.float32)
    for i in range(batch):
        s, e = int(offsets[i]), int(ends[i])
        if e > s:
            pooled[i] = emb[text[s:e]].mean(axis=0)
    return pooled @ w.T + b


if __name__ == "__main__":
    # Small shapes consistent with the module's forward.
    vocab_size, embed_dim, num_class = 64, 32, 4
    batch, total_tokens = 2, 10

    key = jax.random.PRNGKey(0)
    k_emb, k_fc, k_txt = jax.random.split(key, 3)

    # init_weights(): uniform(-0.5, 0.5) for embedding & fc weight, bias zero.
    initrange = 0.5
    emb_weight = jax.random.uniform(
        k_emb, (vocab_size, embed_dim), jnp.float32, -initrange, initrange)
    fc_weight = jax.random.uniform(
        k_fc, (num_class, embed_dim), jnp.float32, -initrange, initrange)
    fc_bias = jnp.zeros((num_class,), jnp.float32)

    # Flat token stream with per-bag offsets (two bags: [0:6), [6:10)).
    text = jax.random.randint(k_txt, (total_tokens,), 0, vocab_size, jnp.int32)
    offsets = jnp.array([0, 6], dtype=jnp.int32)

    out = simple_text_classifier(text, offsets, emb_weight, fc_weight, fc_bias)
    out = jax.block_until_ready(out)

    ref = _reference_forward(text, offsets, emb_weight, fc_weight, fc_bias)
    assert out.shape == (batch, num_class)
    assert np.allclose(np.asarray(out), ref, atol=1e-5, rtol=1e-5), (out, ref)

    print("KERNEL_OK")
</pallas_src>

<mosaic_0001>
module attributes {stable_mosaic.version = 11 : i64} {
  func.func @_classifier_kernel(%arg0: i32, %arg1: memref<128x1xi32, #tpu.memory_space<vmem>>, %arg2: memref<8x1xi32, #tpu.memory_space<vmem>>, %arg3: memref<8x1xi32, #tpu.memory_space<vmem>>, %arg4: memref<8x1xf32, #tpu.memory_space<vmem>>, %arg5: memref<128x128xf32, #tpu.memory_space<vmem>>, %arg6: memref<128x128xf32, #tpu.memory_space<vmem>>, %arg7: memref<1x128xf32, #tpu.memory_space<vmem>>, %arg8: memref<8x128xf32, #tpu.memory_space<vmem>>) attributes {dimension_semantics = [#tpu.dimension_semantics<parallel>], iteration_bounds = array<i64: 1>, scalar_prefetch = 0 : i64, scratch_operands = 0 : i64, tpu.core_type = #tpu.core_type<tc>, window_params = [{pipeline_mode = #tpu.pipeline_mode<synchronous>, transform_indices = @transform_0, window_bounds = array<i64: 128, 1>}, {transform_indices = @transform_1, window_bounds = array<i64: 8, 1>}, {transform_indices = @transform_2, window_bounds = array<i64: 8, 1>}, {transform_indices = @transform_3, window_bounds = array<i64: 8, 1>}, {pipeline_mode = #tpu.pipeline_mode<synchronous>, transform_indices = @transform_4, window_bounds = array<i64: 128, 128>}, {pipeline_mode = #tpu.pipeline_mode<synchronous>, transform_indices = @transform_5, window_bounds = array<i64: 128, 128>}, {pipeline_mode = #tpu.pipeline_mode<synchronous>, transform_indices = @transform_6, window_bounds = array<i64: 1, 128>}, {transform_indices = @transform_7, window_bounds = array<i64: 8, 128>}]} {
    %0 = tpu.iota {dimensions = array<i32: 1>} : vector<8x128xi32>
    %c0 = arith.constant 0 : index
    %c0_0 = arith.constant 0 : index
    %1 = vector.load %arg2[%c0, %c0_0] : memref<8x1xi32, #tpu.memory_space<vmem>>, vector<8x1xi32>
    %2 = vector.broadcast %1 : vector<8x1xi32> to vector<8x128xi32>
    %3 = arith.cmpi sge, %0, %2 : vector<8x128xi32>
    %c0_1 = arith.constant 0 : index
    %c0_2 = arith.constant 0 : index
    %4 = vector.load %arg3[%c0_1, %c0_2] : memref<8x1xi32, #tpu.memory_space<vmem>>, vector<8x1xi32>
    %5 = vector.broadcast %4 : vector<8x1xi32> to vector<8x128xi32>
    %6 = arith.cmpi slt, %0, %5 : vector<8x128xi32>
    %7 = arith.andi %3, %6 : vector<8x128xi1>
    %8 = arith.extui %7 : vector<8x128xi1> to vector<8x128xi32>
    %9 = arith.sitofp %8 : vector<8x128xi32> to vector<8x128xf32>
    %10 = tpu.iota {dimensions = array<i32: 1>} : vector<128x128xi32>
    %c0_3 = arith.constant 0 : index
    %c0_4 = arith.constant 0 : index
    %11 = vector.load %arg1[%c0_3, %c0_4] : memref<128x1xi32, #tpu.memory_space<vmem>>, vector<128x1xi32>
    %12 = vector.broadcast %11 : vector<128x1xi32> to vector<128x128xi32>
    %13 = arith.cmpi eq, %12, %10 : vector<128x128xi32>
    %14 = arith.extui %13 : vector<128x128xi1> to vector<128x128xi32>
    %15 = arith.sitofp %14 : vector<128x128xi32> to vector<128x128xf32>
    %cst = arith.constant dense<0.000000e+00> : vector<8x128xf32>
    %16 = tpu.matmul %9, %15, %cst {dimension_numbers = #tpu.dot_dimension_numbers<[1], [0], [0], [1], [0, 0, 1, 1], [], []>} : vector<8x128xf32>, vector<128x128xf32>, vector<8x128xf32> -> vector<8x128xf32>
    %c0_5 = arith.constant 0 : index
    %c0_6 = arith.constant 0 : index
    %17 = vector.load %arg5[%c0_5, %c0_6] : memref<128x128xf32, #tpu.memory_space<vmem>>, vector<128x128xf32>
    %cst_7 = arith.constant dense<0.000000e+00> : vector<8x128xf32>
    %18 = tpu.matmul %16, %17, %cst_7 {dimension_numbers = #tpu.dot_dimension_numbers<[1], [0], [0], [1], [0, 0, 1, 1], [], []>} : vector<8x128xf32>, vector<128x128xf32>, vector<8x128xf32> -> vector<8x128xf32>
    %c0_8 = arith.constant 0 : index
    %c0_9 = arith.constant 0 : index
    %19 = vector.load %arg4[%c0_8, %c0_9] : memref<8x1xf32, #tpu.memory_space<vmem>>, vector<8x1xf32>
    %20 = vector.broadcast %19 : vector<8x1xf32> to vector<8x128xf32>
    %21 = arith.mulf %18, %20 : vector<8x128xf32>
    %c0_10 = arith.constant 0 : index
    %c0_11 = arith.constant 0 : index
    %22 = vector.load %arg6[%c0_10, %c0_11] : memref<128x128xf32, #tpu.memory_space<vmem>>, vector<128x128xf32>
    %cst_12 = arith.constant dense<0.000000e+00> : vector<8x128xf32>
    %23 = tpu.matmul %21, %22, %cst_12 {dimension_numbers = #tpu.dot_dimension_numbers<[1], [0], [0], [1], [0, 0, 1, 1], [], []>} : vector<8x128xf32>, vector<128x128xf32>, vector<8x128xf32> -> vector<8x128xf32>
    %c0_13 = arith.constant 0 : index
    %c0_14 = arith.constant 0 : index
    %24 = vector.load %arg7[%c0_13, %c0_14] : memref<1x128xf32, #tpu.memory_space<vmem>>, vector<1x128xf32>
    %25 = vector.broadcast %24 : vector<1x128xf32> to vector<8x128xf32>
    %26 = arith.addf %23, %25 : vector<8x128xf32>
    %c0_15 = arith.constant 0 : index
    %c0_16 = arith.constant 0 : index
    %27 = vector.load %arg8[%c0_15, %c0_16] : memref<8x128xf32, #tpu.memory_space<vmem>>, vector<8x128xf32>
    tpu.vector_store %arg8[%c0_15, %c0_16], %26 {strides = array<i32>} : memref<8x128xf32, #tpu.memory_space<vmem>>, vector<8x128xf32>,
    return
  }
  func.func @transform_0(%arg0: i32) -> (i32, i32) {
    %c0_i32 = arith.constant 0 : i32
    %c0_i32_0 = arith.constant 0 : i32
    %c0_i32_1 = arith.constant 0 : i32
    return %c0_i32, %c0_i32_0 : i32, i32
  }
  func.func @transform_1(%arg0: i32) -> (i32, i32) {
    %c0_i32 = arith.constant 0 : i32
    %c0_i32_0 = arith.constant 0 : i32
    return %arg0, %c0_i32 : i32, i32
  }
  func.func @transform_2(%arg0: i32) -> (i32, i32) {
    %c0_i32 = arith.constant 0 : i32
    %c0_i32_0 = arith.constant 0 : i32
    return %arg0, %c0_i32 : i32, i32
  }
  func.func @transform_3(%arg0: i32) -> (i32, i32) {
    %c0_i32 = arith.constant 0 : i32
    %c0_i32_0 = arith.constant 0 : i32
    return %arg0, %c0_i32 : i32, i32
  }
  func.func @transform_4(%arg0: i32) -> (i32, i32) {
    %c0_i32 = arith.constant 0 : i32
    %c0_i32_0 = arith.constant 0 : i32
    %c0_i32_1 = arith.constant 0 : i32
    return %c0_i32, %c0_i32_0 : i32, i32
  }
  func.func @transform_5(%arg0: i32) -> (i32, i32) {
    %c0_i32 = arith.constant 0 : i32
    %c0_i32_0 = arith.constant 0 : i32
    %c0_i32_1 = arith.constant 0 : i32
    return %c0_i32, %c0_i32_0 : i32, i32
  }
  func.func @transform_6(%arg0: i32) -> (i32, i32) {
    %c0_i32 = arith.constant 0 : i32
    %c0_i32_0 = arith.constant 0 : i32
    %c0_i32_1 = arith.constant 0 : i32
    return %c0_i32, %c0_i32_0 : i32, i32
  }
  func.func @transform_7(%arg0: i32) -> (i32, i32) {
    %c0_i32 = arith.constant 0 : i32
    %c0_i32_0 = arith.constant 0 : i32
    return %arg0, %c0_i32 : i32, i32
  }
}

</mosaic_0001>

<llo_original>
// kernel: tpu_custom_call.1
$region0: #{tpu_custom_call.1}
  #allocation0 [shape = 'u32[]', space=smem, size = 0x4, offset = 0x4, fixed_abs, tag = 'smem constant byte address 0x4 - core index']
  #allocation1 [shape = 'u32[144,128]{1,0:T(1,128)}', space=vmem, size = 0x12000, scoped, tag = 'internal scratch']
  %s0 = inlined_call_operand.vmem [shape: s32[128,1], index: 0, kind: input, shape index: {}]
  %s1 = inlined_call_operand.vmem [shape: s32[8,1], index: 1, kind: input, shape index: {}]
  %s2 = inlined_call_operand.vmem [shape: s32[8,1], index: 2, kind: input, shape index: {}]
  %s3 = inlined_call_operand.vmem [shape: f32[8,1], index: 3, kind: input, shape index: {}]
  %s4 = inlined_call_operand.vmem [shape: f32[128,128], index: 4, kind: input, shape index: {}]
  %s5 = inlined_call_operand.hbm [shape: f32[128,128], index: 5, kind: input, shape index: {}]
  %s6 = inlined_call_operand.vmem [shape: f32[1,128], index: 6, kind: input, shape index: {}]
  %s7 = inlined_call_operand.hbm [shape: f32[8,128], index: 7, kind: output, shape index: {}]
  %s8 = sld [smem:[#allocation0]]
  $region42: #{tpu_custom_call.1} parent=0
    _
  %s10 = ssub.s32 1, %s8
  %s11 = scalar_select 0, %s10, %s8
  $region1: #{tpu_custom_call.1} parent=0
    #allocation2 [shape = 'u8[65536]{0}', space=vmem, size = 0x10000, scoped, tag = 'input window, operand 5, single buffered']
    #allocation3 [shape = 's32[1]{0}', space=sflag, size = 0x4, scoped, tag = 'scoped memory for tpu_custom_call.1']
    #allocation4 [shape = 's32[1]{0}', space=sflag, size = 0x4, scoped, tag = 'scoped memory for tpu_custom_call.1']
    #allocation5 [shape = 'u8[4096]{0}', space=vmem, size = 0x1000, scoped, tag = 'output window, operand 0, single buffered']
    %12 = vsyncpa [#allocation3], 0
    %13 = vsyncpa [#allocation4], 0
    // Predicated region
    $region2: #{tpu_custom_call.1} parent=1 // pred_check
      _
    $region3: #{tpu_custom_call.1} parent=1 // pred_check_branch
      %15 = sbr.rel (0) target = $region5
    $region4: #{tpu_custom_call.1} parent=1 // pred_region
      _
    $region5: #{tpu_custom_call.1} parent=1 // pred_fallthru
      _
    // Predicated region
    $region6: #{tpu_custom_call.1} parent=1 // pred_check
      _
    $region7: #{tpu_custom_call.1} parent=1 // pred_check_branch
      %17 = sbr.rel (0) target = $region9
    $region8: #{tpu_custom_call.1} parent=1 // pred_region
      _
    $region9: #{tpu_custom_call.1} parent=1 // pred_fallthru
      _
    // Predicated region
    $region10: #{tpu_custom_call.1} parent=1 // pred_check
      _
    $region11: #{tpu_custom_call.1} parent=1 // pred_check_branch
      %19 = sbr.rel (0) target = $region13
    $region12: #{tpu_custom_call.1} parent=1 // pred_region
      _
    $region13: #{tpu_custom_call.1} parent=1 // pred_fallthru
      _
    // Predicated region
    $region14: #{tpu_custom_call.1} parent=1 // pred_check
      _
    $region15: #{tpu_custom_call.1} parent=1 // pred_check_branch
      %21 = sbr.rel (0) target = $region17
    $region16: #{tpu_custom_call.1} parent=1 // pred_region
      _
    $region17: #{tpu_custom_call.1} parent=1 // pred_fallthru
      _
    // Predicated region
    $region18: #{tpu_custom_call.1} parent=1 // pred_check
      _
    $region19: #{tpu_custom_call.1} parent=1 // pred_check_branch
      %23 = sbr.rel (0) target = $region21
    $region20: #{tpu_custom_call.1} parent=1 // pred_region
      _
    $region21: #{tpu_custom_call.1} parent=1 // pred_fallthru
      _
    // Predicated region
    $region22: #{tpu_custom_call.1} parent=1 // pred_check
      _
    $region23: #{tpu_custom_call.1} parent=1 // pred_check_branch
      %25 = sbr.rel (0) target = $region25
    $region24: #{tpu_custom_call.1} parent=1 // pred_region
      %s27 = ssub.s32 2048, 2048
      %28 = vsyncadd [#allocation3], %s27
      %s29 = sshll.u32 [#allocation2], 4
      %s30 = int_to_ptr.vmem [resolvable:$true] %s29
      %35 = dma.hbm_to_vmem [thread:$0]  %s5, 2048, %s30, [#allocation3], 128, 128, 8
    $region25: #{tpu_custom_call.1} parent=1 // pred_fallthru
      _
    // Predicated region
    $region26: #{tpu_custom_call.1} parent=1 // pred_check
      _
    $region27: #{tpu_custom_call.1} parent=1 // pred_check_branch
      %37 = sbr.rel (0) target = $region29
    $region28: #{tpu_custom_call.1} parent=1 // pred_region
      _
    $region29: #{tpu_custom_call.1} parent=1 // pred_fallthru
      _
    // Predicated region
    $region30: #{tpu_custom_call.1} parent=1 // pred_check
      _
    $region31: #{tpu_custom_call.1} parent=1 // pred_check_branch
      %39 = sbr.rel (0) target = $region33
    $region32: #{tpu_custom_call.1} parent=1 // pred_region
      %40 = dma.done [#allocation3], 2048
    $region33: #{tpu_custom_call.1} parent=1 // pred_fallthru
      _
    %v41 = vlaneseq
    %v42 = vand.u32 %v41, 127
    %v43 = vld [vmem:[%s1] sm:$0xff]
    %44 = vset.pattern.permute.xlu0 0
    %45 = vperm.xlu0 %44, %v43
    %v46 = vpop.permute.xlu0 %45
    %vm47 = vcmp.ge.s32.totalorder %v42, %v46
    %v48 = vld [vmem:[%s2] sm:$0xff]
    %49 = vset.pattern.permute.xlu0 0
    %50 = vperm.xlu0 %49, %v48
    %v51 = vpop.permute.xlu0 %50
    %vm52 = vcmp.lt.s32.totalorder %v42, %v51
    %vm53 = vmand %vm47, %vm52
    %v54 = vsel %vm53, 1, 0
    %v55 = vcvt.s32.f32 %v54
    %v56 = vld [vmem:[%s0] sm:$0xff]
    %v57 = vld [vmem:[%s0 + $0x8] sm:$0xff]
    %v58 = vld [vmem:[%s0 + $0x10] sm:$0xff]
    %v59 = vld [vmem:[%s0 + $0x18] sm:$0xff]
    %v60 = vld [vmem:[%s0 + $0x20] sm:$0xff]
    %v61 = vld [vmem:[%s0 + $0x28] sm:$0xff]
    %v62 = vld [vmem:[%s0 + $0x30] sm:$0xff]
    %v63 = vld [vmem:[%s0 + $0x38] sm:$0xff]
    %v64 = vld [vmem:[%s0 + $0x40] sm:$0xff]
    %v65 = vld [vmem:[%s0 + $0x48] sm:$0xff]
    %v66 = vld [vmem:[%s0 + $0x50] sm:$0xff]
    %v67 = vld [vmem:[%s0 + $0x58] sm:$0xff]
    %v68 = vld [vmem:[%s0 + $0x60] sm:$0xff]
    %v69 = vld [vmem:[%s0 + $0x68] sm:$0xff]
    %v70 = vld [vmem:[%s0 + $0x70] sm:$0xff]
    %v71 = vld [vmem:[%s0 + $0x78] sm:$0xff]
    %72 = vset.pattern.permute.xlu0 0
    %73 = vperm.xlu0 %72, %v56
    %v74 = vpop.permute.xlu0 %73
    %75 = vset.pattern.permute.xlu0 0
    %76 = vperm.xlu0 %75, %v57
    %v77 = vpop.permute.xlu0 %76
    %78 = vset.pattern.permute.xlu0 0
    %79 = vperm.xlu0 %78, %v58
    %v80 = vpop.permute.xlu0 %79
    %81 = vset.pattern.permute.xlu0 0
    %82 = vperm.xlu0 %81, %v59
    %v83 = vpop.permute.xlu0 %82
    %84 = vset.pattern.permute.xlu0 0
    %85 = vperm.xlu0 %84, %v60
    %v86 = vpop.permute.xlu0 %85
    %87 = vset.pattern.permute.xlu0 0
    %88 = vperm.xlu0 %87, %v61
    %v89 = vpop.permute.xlu0 %88
    %90 = vset.pattern.permute.xlu0 0
    %91 = vperm.xlu0 %90, %v62
    %v92 = vpop.permute.xlu0 %91
    %93 = vset.pattern.permute.xlu0 0
    %94 = vperm.xlu0 %93, %v63
    %v95 = vpop.permute.xlu0 %94
    %96 = vset.pattern.permute.xlu0 0
    %97 = vperm.xlu0 %96, %v64
    %v98 = vpop.permute.xlu0 %97
    %99 = vset.pattern.permute.xlu0 0
    %100 = vperm.xlu0 %99, %v65
    %v101 = vpop.permute.xlu0 %100
    %102 = vset.pattern.permute.xlu0 0
    %103 = vperm.xlu0 %102, %v66
    %v104 = vpop.permute.xlu0 %103
    %105 = vset.pattern.permute.xlu0 0
    %106 = vperm.xlu0 %105, %v67
    %v107 = vpop.permute.xlu0 %106
    %108 = vset.pattern.permute.xlu0 0
    %109 = vperm.xlu0 %108, %v68
    %v110 = vpop.permute.xlu0 %109
    %111 = vset.pattern.permute.xlu0 0
    %112 = vperm.xlu0 %111, %v69
    %v113 = vpop.permute.xlu0 %112
    %114 = vset.pattern.permute.xlu0 0
    %115 = vperm.xlu0 %114, %v70
    %v116 = vpop.permute.xlu0 %115
    %117 = vset.pattern.permute.xlu0 0
    %118 = vperm.xlu0 %117, %v71
    %v119 = vpop.permute.xlu0 %118
    %vm120 = vcmp.eq.s32.totalorder %v74, %v42
    %vm121 = vcmp.eq.s32.totalorder %v77, %v42
    %vm122 = vcmp.eq.s32.totalorder %v80, %v42
    %vm123 = vcmp.eq.s32.totalorder %v83, %v42
    %vm124 = vcmp.eq.s32.totalorder %v86, %v42
    %vm125 = vcmp.eq.s32.totalorder %v89, %v42
    %vm126 = vcmp.eq.s32.totalorder %v92, %v42
    %vm127 = vcmp.eq.s32.totalorder %v95, %v42
    %vm128 = vcmp.eq.s32.totalorder %v98, %v42
    %vm129 = vcmp.eq.s32.totalorder %v101, %v42
    %vm130 = vcmp.eq.s32.totalorder %v104, %v42
    %vm131 = vcmp.eq.s32.totalorder %v107, %v42
    %vm132 = vcmp.eq.s32.totalorder %v110, %v42
    %vm133 = vcmp.eq.s32.totalorder %v113, %v42
    %vm134 = vcmp.eq.s32.totalorder %v116, %v42
    %vm135 = vcmp.eq.s32.totalorder %v119, %v42
    %v136 = vsel %vm120, 1, 0
    %v137 = vsel %vm121, 1, 0
    %v138 = vsel %vm122, 1, 0
    %v139 = vsel %vm123, 1, 0
    %v140 = vsel %vm124, 1, 0
    %v141 = vsel %vm125, 1, 0
    %v142 = vsel %vm126, 1, 0
    %v143 = vsel %vm127, 1, 0
    %v144 = vsel %vm128, 1, 0
    %v145 = vsel %vm129, 1, 0
    %v146 = vsel %vm130, 1, 0
    %v147 = vsel %vm131, 1, 0
    %v148 = vsel %vm132, 1, 0
    %v149 = vsel %vm133, 1, 0
    %v150 = vsel %vm134, 1, 0
    %v151 = vsel %vm135, 1, 0
    %v152 = vcvt.s32.f32 %v136
    %v153 = vcvt.s32.f32 %v137
    %v154 = vcvt.s32.f32 %v138
    %v155 = vcvt.s32.f32 %v139
    %v156 = vcvt.s32.f32 %v140
    %v157 = vcvt.s32.f32 %v141
    %v158 = vcvt.s32.f32 %v142
    %v159 = vcvt.s32.f32 %v143
    %v160 = vcvt.s32.f32 %v144
    %v161 = vcvt.s32.f32 %v145
    %v162 = vcvt.s32.f32 %v146
    %v163 = vcvt.s32.f32 %v147
    %v164 = vcvt.s32.f32 %v148
    %v165 = vcvt.s32.f32 %v149
    %v166 = vcvt.s32.f32 %v150
    %v167 = vcvt.s32.f32 %v151
    %168 = vmatprep.subr.mxu0 0.0
    %169 = vmatpush1.msra.mxu0 %v152
    %170 = vmatprep.subr.mxu0 0.0
    %171 = vmatpush1.msra.mxu0 %v153
    %172 = vmatprep.subr.mxu0 0.0
    %173 = vmatpush1.msra.mxu0 %v154
    %174 = vmatprep.subr.mxu0 0.0
    %175 = vmatpush1.msra.mxu0 %v155
    %176 = vmatprep.subr.mxu0 0.0
    %177 = vmatpush1.msra.mxu0 %v156
    %178 = vmatprep.subr.mxu0 0.0
    %179 = vmatpush1.msra.mxu0 %v157
    %180 = vmatprep.subr.mxu0 0.0
    %181 = vmatpush1.msra.mxu0 %v158
    %182 = vmatprep.subr.mxu0 0.0
    %183 = vmatpush1.msra.mxu0 %v159
    %184 = vmatprep.subr.mxu0 0.0
    %185 = vmatpush1.msra.mxu0 %v160
    %186 = vmatprep.subr.mxu0 0.0
    %187 = vmatpush1.msra.mxu0 %v161
    %188 = vmatprep.subr.mxu0 0.0
    %189 = vmatpush1.msra.mxu0 %v162
    %190 = vmatprep.subr.mxu0 0.0
    %191 = vmatpush1.msra.mxu0 %v163
    %192 = vmatprep.subr.mxu0 0.0
    %193 = vmatpush1.msra.mxu0 %v164
    %194 = vmatprep.subr.mxu0 0.0
    %195 = vmatpush1.msra.mxu0 %v165
    %196 = vmatprep.subr.mxu0 0.0
    %197 = vmatpush1.msra.mxu0 %v166
    %198 = vmatprep.subr.mxu0 0.0
    %199 = vmatpush1.msra.mxu0 %v167
    %200 = vmatprep.subr.mxu0 0.0
    %201 = vmatpush1.msra.mxu0 0.0
    %202 = vmatprep.subr.mxu0 0.0
    %203 = vmatpush1.msra.mxu0 0.0
    %204 = vmatprep.subr.mxu0 0.0
    %205 = vmatpush1.msra.mxu0 0.0
    %206 = vmatprep.subr.mxu0 0.0
    %207 = vmatpush1.msra.mxu0 0.0
    %208 = vmatprep.subr.mxu0 0.0
    %209 = vmatpush1.msra.mxu0 0.0
    %210 = vmatprep.subr.mxu0 0.0
    %211 = vmatpush1.msra.mxu0 0.0
    %212 = vmatprep.subr.mxu0 0.0
    %213 = vmatpush1.msra.mxu0 0.0
    %214 = vmatprep.subr.mxu0 0.0
    %215 = vmatpush1.msra.mxu0 0.0
    %216 = vmatprep.subr.mxu0 0.0
    %217 = vmatpush1.msra.mxu0 0.0
    %218 = vmatprep.subr.mxu0 0.0
    %219 = vmatpush1.msra.mxu0 0.0
    %220 = vmatprep.subr.mxu0 0.0
    %221 = vmatpush1.msra.mxu0 0.0
    %222 = vmatprep.subr.mxu0 0.0
    %223 = vmatpush1.msra.mxu0 0.0
    %224 = vmatprep.subr.mxu0 0.0
    %225 = vmatpush1.msra.mxu0 0.0
    %226 = vmatprep.subr.mxu0 0.0
    %227 = vmatpush1.msra.mxu0 0.0
    %228 = vmatprep.subr.mxu0 0.0
    %229 = vmatpush1.msra.mxu0 0.0
    %230 = vmatprep.subr.mxu0 0.0
    %231 = vmatpush1.msra.mxu0 0.0
    %232 = vmatprep.mubr.f32.mxu0 0.0
    %233 = vmatmul.mubr.f32.gmra.mrb[0].mxu0 %v55
    %v234 = vpop.f32.mrb[0].mxu0
    %v235 = vadd.f32 0.0, %v234
    %v236 = vpop.f32.mrb[0].mxu0
    %237 = vdwg.mxu0
    %v238 = vld [vmem:[%s4] sm:$0xff]
    %v239 = vld [vmem:[%s4 + $0x8] sm:$0xff]
    %v240 = vld [vmem:[%s4 + $0x10] sm:$0xff]
    %v241 = vld [vmem:[%s4 + $0x18] sm:$0xff]
    %v242 = vld [vmem:[%s4 + $0x20] sm:$0xff]
    %v243 = vld [vmem:[%s4 + $0x28] sm:$0xff]
    %v244 = vld [vmem:[%s4 + $0x30] sm:$0xff]
    %v245 = vld [vmem:[%s4 + $0x38] sm:$0xff]
    %v246 = vld [vmem:[%s4 + $0x40] sm:$0xff]
    %v247 = vld [vmem:[%s4 + $0x48] sm:$0xff]
    %v248 = vld [vmem:[%s4 + $0x50] sm:$0xff]
    %v249 = vld [vmem:[%s4 + $0x58] sm:$0xff]
    %v250 = vld [vmem:[%s4 + $0x60] sm:$0xff]
    %v251 = vld [vmem:[%s4 + $0x68] sm:$0xff]
    %v252 = vld [vmem:[%s4 + $0x70] sm:$0xff]
    %v253 = vld [vmem:[%s4 + $0x78] sm:$0xff]
    %254 = vmatprep.subr.mxu0 0.0
    %255 = vmatpush1.msra.mxu0 %v238
    %256 = vmatprep.subr.mxu0 0.0
    %257 = vmatpush1.msra.mxu0 %v239
    %258 = vmatprep.subr.mxu0 0.0
    %259 = vmatpush1.msra.mxu0 %v240
    %260 = vmatprep.subr.mxu0 0.0
    %261 = vmatpush1.msra.mxu0 %v241
    %262 = vmatprep.subr.mxu0 0.0
    %263 = vmatpush1.msra.mxu0 %v242
    %264 = vmatprep.subr.mxu0 0.0
    %265 = vmatpush1.msra.mxu0 %v243
    %266 = vmatprep.subr.mxu0 0.0
    %267 = vmatpush1.msra.mxu0 %v244
    %268 = vmatprep.subr.mxu0 0.0
    %269 = vmatpush1.msra.mxu0 %v245
    %270 = vmatprep.subr.mxu0 0.0
    %271 = vmatpush1.msra.mxu0 %v246
    %272 = vmatprep.subr.mxu0 0.0
    %273 = vmatpush1.msra.mxu0 %v247
    %274 = vmatprep.subr.mxu0 0.0
    %275 = vmatpush1.msra.mxu0 %v248
    %276 = vmatprep.subr.mxu0 0.0
    %277 = vmatpush1.msra.mxu0 %v249
    %278 = vmatprep.subr.mxu0 0.0
    %279 = vmatpush1.msra.mxu0 %v250
    %280 = vmatprep.subr.mxu0 0.0
    %281 = vmatpush1.msra.mxu0 %v251
    %282 = vmatprep.subr.mxu0 0.0
    %283 = vmatpush1.msra.mxu0 %v252
    %284 = vmatprep.subr.mxu0 0.0
    %285 = vmatpush1.msra.mxu0 %v253
    %286 = vmatprep.subr.mxu0 0.0
    %287 = vmatpush1.msra.mxu0 0.0
    %288 = vmatprep.subr.mxu0 0.0
    %289 = vmatpush1.msra.mxu0 0.0
    %290 = vmatprep.subr.mxu0 0.0
    %291 = vmatpush1.msra.mxu0 0.0
    %292 = vmatprep.subr.mxu0 0.0
    %293 = vmatpush1.msra.mxu0 0.0
    %294 = vmatprep.subr.mxu0 0.0
    %295 = vmatpush1.msra.mxu0 0.0
    %296 = vmatprep.subr.mxu0 0.0
    %297 = vmatpush1.msra.mxu0 0.0
    %298 = vmatprep.subr.mxu0 0.0
    %299 = vmatpush1.msra.mxu0 0.0
    %300 = vmatprep.subr.mxu0 0.0
    %301 = vmatpush1.msra.mxu0 0.0
    %302 = vmatprep.subr.mxu0 0.0
    %303 = vmatpush1.msra.mxu0 0.0
    %304 = vmatprep.subr.mxu0 0.0
    %305 = vmatpush1.msra.mxu0 0.0
    %306 = vmatprep.subr.mxu0 0.0
    %307 = vmatpush1.msra.mxu0 0.0
    %308 = vmatprep.subr.mxu0 0.0
    %309 = vmatpush1.msra.mxu0 0.0
    %310 = vmatprep.subr.mxu0 0.0
    %311 = vmatpush1.msra.mxu0 0.0
    %312 = vmatprep.subr.mxu0 0.0
    %313 = vmatpush1.msra.mxu0 0.0
    %314 = vmatprep.subr.mxu0 0.0
    %315 = vmatpush1.msra.mxu0 0.0
    %316 = vmatprep.subr.mxu0 0.0
    %317 = vmatpush1.msra.mxu0 0.0
    %318 = vmatprep.mubr.f32.mxu0 0.0
    %319 = vmatmul.mubr.f32.gmra.mrb[0].mxu0 %v235
    %v320 = vpop.f32.mrb[0].mxu0
    %v321 = vadd.f32 0.0, %v320
    %v322 = vpop.f32.mrb[0].mxu0
    %323 = vdwg.mxu0
    %v324 = vld [vmem:[%s3] sm:$0xff]
    %326 = vset.pattern.permute.xlu0 0
    %327 = vperm.xlu0 %326, %v324
    %v328 = vpop.permute.xlu0 %327
    %v330 = vmul.f32 %v321, %v328
    %v331 = vld [vmem:[#allocation2] sm:$0xff]
    %v332 = vld [vmem:[#allocation2 + $0x8] sm:$0xff]
    %v333 = vld [vmem:[#allocation2 + $0x10] sm:$0xff]
    %v334 = vld [vmem:[#allocation2 + $0x18] sm:$0xff]
    %v335 = vld [vmem:[#allocation2 + $0x20] sm:$0xff]
    %v336 = vld [vmem:[#allocation2 + $0x28] sm:$0xff]
    %v337 = vld [vmem:[#allocation2 + $0x30] sm:$0xff]
    %v338 = vld [vmem:[#allocation2 + $0x38] sm:$0xff]
    %v339 = vld [vmem:[#allocation2 + $0x40] sm:$0xff]
    %v340 = vld [vmem:[#allocation2 + $0x48] sm:$0xff]
    %v341 = vld [vmem:[#allocation2 + $0x50] sm:$0xff]
    %v342 = vld [vmem:[#allocation2 + $0x58] sm:$0xff]
    %v343 = vld [vmem:[#allocation2 + $0x60] sm:$0xff]
    %v344 = vld [vmem:[#allocation2 + $0x68] sm:$0xff]
    %v345 = vld [vmem:[#allocation2 + $0x70] sm:$0xff]
    %v346 = vld [vmem:[#allocation2 + $0x78] sm:$0xff]
    %v347 = vld [vmem:[%s6] sm:$0x1]
    %v349 = vlaneseq
    %v350 = vshrl.u32 %v349, 7
    %v351 = vsub.s32 0, %v350
    %v352 = vrot.slane %v347, %v351
    %354 = vmatprep.subr.mxu0 0.0
    %355 = vmatpush1.msra.mxu0 %v331
    %356 = vmatprep.subr.mxu0 0.0
    %357 = vmatpush1.msra.mxu0 %v332
    %358 = vmatprep.subr.mxu0 0.0
    %359 = vmatpush1.msra.mxu0 %v333
    %360 = vmatprep.subr.mxu0 0.0
    %361 = vmatpush1.msra.mxu0 %v334
    %362 = vmatprep.subr.mxu0 0.0
    %363 = vmatpush1.msra.mxu0 %v335
    %364 = vmatprep.subr.mxu0 0.0
    %365 = vmatpush1.msra.mxu0 %v336
    %366 = vmatprep.subr.mxu0 0.0
    %367 = vmatpush1.msra.mxu0 %v337
    %368 = vmatprep.subr.mxu0 0.0
    %369 = vmatpush1.msra.mxu0 %v338
    %370 = vmatprep.subr.mxu0 0.0
    %371 = vmatpush1.msra.mxu0 %v339
    %372 = vmatprep.subr.mxu0 0.0
    %373 = vmatpush1.msra.mxu0 %v340
    %374 = vmatprep.subr.mxu0 0.0
    %375 = vmatpush1.msra.mxu0 %v341
    %376 = vmatprep.subr.mxu0 0.0
    %377 = vmatpush1.msra.mxu0 %v342
    %378 = vmatprep.subr.mxu0 0.0
    %379 = vmatpush1.msra.mxu0 %v343
    %380 = vmatprep.subr.mxu0 0.0
    %381 = vmatpush1.msra.mxu0 %v344
    %382 = vmatprep.subr.mxu0 0.0
    %383 = vmatpush1.msra.mxu0 %v345
    %384 = vmatprep.subr.mxu0 0.0
    %385 = vmatpush1.msra.mxu0 %v346
    %386 = vmatprep.subr.mxu0 0.0
    %387 = vmatpush1.msra.mxu0 0.0
    %388 = vmatprep.subr.mxu0 0.0
    %389 = vmatpush1.msra.mxu0 0.0
    %390 = vmatprep.subr.mxu0 0.0
    %391 = vmatpush1.msra.mxu0 0.0
    %392 = vmatprep.subr.mxu0 0.0
    %393 = vmatpush1.msra.mxu0 0.0
    %394 = vmatprep.subr.mxu0 0.0
    %395 = vmatpush1.msra.mxu0 0.0
    %396 = vmatprep.subr.mxu0 0.0
    %397 = vmatpush1.msra.mxu0 0.0
    %398 = vmatprep.subr.mxu0 0.0
    %399 = vmatpush1.msra.mxu0 0.0
    %400 = vmatprep.subr.mxu0 0.0
    %401 = vmatpush1.msra.mxu0 0.0
    %402 = vmatprep.subr.mxu0 0.0
    %403 = vmatpush1.msra.mxu0 0.0
    %404 = vmatprep.subr.mxu0 0.0
    %405 = vmatpush1.msra.mxu0 0.0
    %406 = vmatprep.subr.mxu0 0.0
    %407 = vmatpush1.msra.mxu0 0.0
    %408 = vmatprep.subr.mxu0 0.0
    %409 = vmatpush1.msra.mxu0 0.0
    %410 = vmatprep.subr.mxu0 0.0
    %411 = vmatpush1.msra.mxu0 0.0
    %412 = vmatprep.subr.mxu0 0.0
    %413 = vmatpush1.msra.mxu0 0.0
    %414 = vmatprep.subr.mxu0 0.0
    %415 = vmatpush1.msra.mxu0 0.0
    %416 = vmatprep.subr.mxu0 0.0
    %417 = vmatpush1.msra.mxu0 0.0
    %418 = vmatprep.mubr.f32.mxu0 0.0
    %419 = vmatmul.mubr.f32.gmra.mrb[0].mxu0 %v330
    %v420 = vpop.f32.mrb[0].mxu0
    %v421 = vadd.f32 %v352, %v420
    %v422 = vpop.f32.mrb[0].mxu0
    %423 = vdwg.mxu0
    %424 = vst [vmem:[#allocation5] sm:$0xff] %v421
    // Predicated region
    $region34: #{tpu_custom_call.1} parent=1 // pred_check
      _
    $region35: #{tpu_custom_call.1} parent=1 // pred_check_branch
      %426 = sbr.rel (0) target = $region37
    $region36: #{tpu_custom_call.1} parent=1 // pred_region
      %s428 = ssub.s32 128, 128
      %429 = vsyncadd [#allocation4], %s428
      %s431 = sshll.u32 [#allocation5], 4
      %s432 = int_to_ptr.vmem [resolvable:$true] %s431
      %434 = dma.vmem_to_hbm [thread:$0]  %s432, 128, %s7, [#allocation4]
    $region37: #{tpu_custom_call.1} parent=1 // pred_fallthru
      _
    // Predicated region
    $region38: #{tpu_custom_call.1} parent=1 // pred_check
      _
    $region39: #{tpu_custom_call.1} parent=1 // pred_check_branch
      %436 = sbr.rel (0) target = $region41
    $region40: #{tpu_custom_call.1} parent=1 // pred_region
      %437 = dma.done [#allocation4], 128
    $region41: #{tpu_custom_call.1} parent=1 // pred_fallthru
      _
    %438 = vsyncpa [#allocation3], 1
    %439 = vsyncpa [#allocation4], 1

</llo_original>
